<compile_context>
chip_gen: v5e
topology: v5e:2x2
jax: 0.10.0
libtpu: 0.0.40
codegen_flags: <defaults>
</compile_context>

<pallas_src>
import math

import jax
import jax.numpy as jnp
import numpy as np
from jax.experimental import pallas as pl
from jax.experimental.pallas import tpu as pltpu


def _round_up(x: int, m: int) -> int:
    return (x + m - 1) // m * m


def make_sinusoidal_pe(d_model: int, max_time: float = 10000.0,
                       out_dtype=jnp.float32,
                       out_tile_bytes: int = 2 * 1024 * 1024):
    """Returns a callable onset_times[B, S] -> embeddings[B, S, d_model]."""
    # ---- host-side constants (built once) ----
    # Pack k consecutive rows into one lane-dense output row of width W = k*d_model,
    # chosen so W is a multiple of 128 lanes (unmasked stores).
    if d_model % 128 == 0:
        k = 1
    else:
        k = math.lcm(d_model, 128) // d_model
        if k > 8:
            # TODO(synk): pathological d_model (odd / not a nice divisor of 128):
            # fall back to unpacked, masked stores instead of blowing up VPU work.
            k = 1
    W = k * d_model

    d_idx = np.arange(d_model)
    # pair-replicated frequency: div[d] = exp(2*floor(d/2) * (-ln(max_time)/d_model))
    div = np.exp((2 * (d_idx // 2)).astype(np.float32)
                 * np.float32(-math.log(max_time) / d_model))           # (D,)
    odd = (d_idx % 2 == 1).astype(np.float32)                           # (D,)
    # const row 0: odd-lane mask tiled to W; rows 1..k: per-segment div (zeros elsewhere)
    const_np = np.zeros((1 + k, W), np.float32)
    const_np[0] = np.tile(odd, k)
    for s in range(k):
        const_np[1 + s, s * d_model:(s + 1) * d_model] = div
    const = jnp.asarray(const_np)

    def pe_kernel(onset_ref, const_ref, out_ref):
        pos = onset_ref[...]                            # (TR, k)  rows on sublanes
        # t[r, s*D + d] = pos[r, s] * div[d]  -- exact f32 (constants are 0/1-structured)
        t = pos[:, 0:1] * const_ref[1:2, :]
        for s in range(1, k):                           # unrolled at trace time, k <= 8
            t = t + pos[:, s:s + 1] * const_ref[1 + s:2 + s, :]
        odd_mask = const_ref[0:1, :] > 0.5
        # exact sin/cos; transcendental cost is hidden under the output-store bandwidth.
        out_ref[...] = jnp.where(odd_mask, jnp.cos(t), jnp.sin(t)).astype(out_ref.dtype)

    def forward(onset_times: jax.Array) -> jax.Array:
        B, S = onset_times.shape
        rows = B * S
        rows_p = _round_up(rows, k)
        onset_flat = onset_times.astype(jnp.float32).reshape(rows)
        if rows_p != rows:
            onset_flat = jnp.pad(onset_flat, (0, rows_p - rows))
        R = rows_p // k
        onset_packed = onset_flat.reshape(R, k)          # contiguous region in HBM

        # Largest ~2 MiB lane-dense output block; 1-D grid over packed rows.
        target_rows = max(8, (out_tile_bytes // (W * 4)) // 8 * 8)
        if R <= target_rows:
            tr = R                                       # full extent (allowed even if <8)
        else:
            tr = target_rows
            steps = pl.cdiv(R, tr)
            if steps % 2 == 1:                           # keep v7x's two TCs balanced
                tr = max(8, _round_up(pl.cdiv(R, steps + 1), 8))
        grid = (pl.cdiv(R, tr),)

        cost = pl.CostEstimate(
            flops=int(2 * k * R * W),
            transcendentals=int(2 * R * W),
            bytes_accessed=int(4 * R * W + 4 * rows_p + const.size * 4),
        )

        out_packed = pl.pallas_call(
            pe_kernel,
            out_shape=jax.ShapeDtypeStruct((R, W), out_dtype),
            grid=grid,
            in_specs=[
                pl.BlockSpec((tr, k), lambda i: (i, 0)),          # onset rows (packed)
                pl.BlockSpec((1 + k, W), lambda i: (0, 0)),       # tiny constant table
            ],
            out_specs=pl.BlockSpec((tr, W), lambda i: (i, 0)),
            compiler_params=pltpu.CompilerParams(
                dimension_semantics=("parallel",),
                vmem_limit_bytes=32 * 1024 * 1024,
            ),
            cost_estimate=cost,
        )(onset_packed, const)

        out = out_packed.reshape(rows_p, d_model)
        if rows_p != rows:
            out = out[:rows]
        return out.reshape(B, S, d_model)
        # TODO(synk): if the PE is immediately added to an activation downstream, fuse
        # that add here (extra tiled input, same block shape) to halve HBM traffic, or
        # pass out_dtype=jnp.bfloat16 if the consumer accepts it.

    return forward


def _reference_pe(onset_times, d_model, max_time=10000.0):
    """Pure-JAX mirror of the PyTorch forward, for verification (even d_model)."""
    pos = onset_times[:, :, None].astype(jnp.float32)                       # (B, S, 1)
    div = jnp.exp(jnp.arange(0, d_model, 2, dtype=jnp.float32)
                  * (-math.log(max_time) / d_model))                        # (D/2,)
    B, S = onset_times.shape
    emb = jnp.zeros((B, S, d_model), jnp.float32)
    emb = emb.at[:, :, 0::2].set(jnp.sin(pos * div))
    emb = emb.at[:, :, 1::2].set(jnp.cos(pos * div))
    return emb


if __name__ == "__main__":
    B, S, D = 2, 8, 32
    key = jax.random.PRNGKey(0)
    # Onset times: non-negative floats (seconds/ticks of music events).
    onset_times = jax.random.uniform(key, (B, S), dtype=jnp.float32, minval=0.0, maxval=100.0)

    pe = make_sinusoidal_pe(d_model=D, max_time=10000)
    out = jax.block_until_ready(pe(onset_times))

    ref = _reference_pe(onset_times, D)
    assert out.shape == (B, S, D) and out.dtype == jnp.float32
    assert jnp.allclose(out, ref, atol=1e-5, rtol=1e-5), "mismatch vs reference"
    print("KERNEL_OK")
</pallas_src>

<mosaic_0001>
module attributes {stable_mosaic.version = 11 : i64} {
  func.func @pe_kernel(%arg0: i32, %arg1: memref<4x4xf32, #tpu.memory_space<vmem>>, %arg2: memref<5x128xf32, #tpu.memory_space<vmem>>, %arg3: memref<4x128xf32, #tpu.memory_space<vmem>>) attributes {dimension_semantics = [#tpu.dimension_semantics<parallel>], iteration_bounds = array<i64: 1>, scalar_prefetch = 0 : i64, scratch_operands = 0 : i64, tpu.core_type = #tpu.core_type<tc>, window_params = [{transform_indices = @transform_0, window_bounds = array<i64: 4, 4>}, {pipeline_mode = #tpu.pipeline_mode<synchronous>, transform_indices = @transform_1, window_bounds = array<i64: 5, 128>}, {transform_indices = @transform_2, window_bounds = array<i64: 4, 128>}]} {
    %c0 = arith.constant 0 : index
    %c0_0 = arith.constant 0 : index
    %0 = vector.load %arg1[%c0, %c0_0] : memref<4x4xf32, #tpu.memory_space<vmem>>, vector<4x4xf32>
    %1 = vector.extract_strided_slice %0 {offsets = [0, 0], sizes = [4, 1], strides = [1, 1]} : vector<4x4xf32> to vector<4x1xf32>
    %c1 = arith.constant 1 : index
    %c0_1 = arith.constant 0 : index
    %2 = vector.load %arg2[%c1, %c0_1] : memref<5x128xf32, #tpu.memory_space<vmem>>, vector<1x128xf32>
    %3 = vector.broadcast %1 : vector<4x1xf32> to vector<4x128xf32>
    %4 = vector.broadcast %2 : vector<1x128xf32> to vector<4x128xf32>
    %5 = arith.mulf %3, %4 : vector<4x128xf32>
    %6 = vector.extract_strided_slice %0 {offsets = [0, 1], sizes = [4, 1], strides = [1, 1]} : vector<4x4xf32> to vector<4x1xf32>
    %c2 = arith.constant 2 : index
    %c0_2 = arith.constant 0 : index
    %7 = vector.load %arg2[%c2, %c0_2] : memref<5x128xf32, #tpu.memory_space<vmem>>, vector<1x128xf32>
    %8 = vector.broadcast %6 : vector<4x1xf32> to vector<4x128xf32>
    %9 = vector.broadcast %7 : vector<1x128xf32> to vector<4x128xf32>
    %10 = arith.mulf %8, %9 : vector<4x128xf32>
    %11 = arith.addf %5, %10 : vector<4x128xf32>
    %12 = vector.extract_strided_slice %0 {offsets = [0, 2], sizes = [4, 1], strides = [1, 1]} : vector<4x4xf32> to vector<4x1xf32>
    %c3 = arith.constant 3 : index
    %c0_3 = arith.constant 0 : index
    %13 = vector.load %arg2[%c3, %c0_3] : memref<5x128xf32, #tpu.memory_space<vmem>>, vector<1x128xf32>
    %14 = vector.broadcast %12 : vector<4x1xf32> to vector<4x128xf32>
    %15 = vector.broadcast %13 : vector<1x128xf32> to vector<4x128xf32>
    %16 = arith.mulf %14, %15 : vector<4x128xf32>
    %17 = arith.addf %11, %16 : vector<4x128xf32>
    %18 = vector.extract_strided_slice %0 {offsets = [0, 3], sizes = [4, 1], strides = [1, 1]} : vector<4x4xf32> to vector<4x1xf32>
    %c4 = arith.constant 4 : index
    %c0_4 = arith.constant 0 : index
    %19 = vector.load %arg2[%c4, %c0_4] : memref<5x128xf32, #tpu.memory_space<vmem>>, vector<1x128xf32>
    %20 = vector.broadcast %18 : vector<4x1xf32> to vector<4x128xf32>
    %21 = vector.broadcast %19 : vector<1x128xf32> to vector<4x128xf32>
    %22 = arith.mulf %20, %21 : vector<4x128xf32>
    %23 = arith.addf %17, %22 : vector<4x128xf32>
    %c0_5 = arith.constant 0 : index
    %c0_6 = arith.constant 0 : index
    %24 = vector.load %arg2[%c0_5, %c0_6] : memref<5x128xf32, #tpu.memory_space<vmem>>, vector<1x128xf32>
    %cst = arith.constant 5.000000e-01 : f32
    %25 = vector.broadcast %cst : f32 to vector<1x128xf32>
    %26 = arith.cmpf ogt, %24, %25 : vector<1x128xf32>
    %27 = math.cos %23 : vector<4x128xf32>
    %28 = math.sin %23 : vector<4x128xf32>
    %29 = vector.shape_cast %26 : vector<1x128xi1> to vector<1x128xi1>
    %30 = vector.broadcast %29 : vector<1x128xi1> to vector<4x128xi1>
    %31 = arith.select %30, %27, %28 : vector<4x128xi1>, vector<4x128xf32>
    %c0_7 = arith.constant 0 : index
    %c0_8 = arith.constant 0 : index
    %32 = vector.load %arg3[%c0_7, %c0_8] : memref<4x128xf32, #tpu.memory_space<vmem>>, vector<4x128xf32>
    tpu.vector_store %arg3[%c0_7, %c0_8], %31 {strides = array<i32>} : memref<4x128xf32, #tpu.memory_space<vmem>>, vector<4x128xf32>,
    return
  }
  func.func @transform_0(%arg0: i32) -> (i32, i32) {
    %c0_i32 = arith.constant 0 : i32
    %c0_i32_0 = arith.constant 0 : i32
    return %arg0, %c0_i32 : i32, i32
  }
  func.func @transform_1(%arg0: i32) -> (i32, i32) {
    %c0_i32 = arith.constant 0 : i32
    %c0_i32_0 = arith.constant 0 : i32
    %c0_i32_1 = arith.constant 0 : i32
    return %c0_i32, %c0_i32_0 : i32, i32
  }
  func.func @transform_2(%arg0: i32) -> (i32, i32) {
    %c0_i32 = arith.constant 0 : i32
    %c0_i32_0 = arith.constant 0 : i32
    return %arg0, %c0_i32 : i32, i32
  }
}

</mosaic_0001>

<llo_original>
// kernel: tpu_custom_call.1
$region0: #{tpu_custom_call.1}
  #allocation0 [shape = 'u32[]', space=smem, size = 0x4, offset = 0x4, fixed_abs, tag = 'smem constant byte address 0x4 - core index']
  #allocation1 [shape = 'u32[72,128]{1,0:T(1,128)}', space=vmem, size = 0x9000, scoped, tag = 'internal scratch']
  %s0 = inlined_call_operand.hbm [shape: f32[4,4], index: 0, kind: input, shape index: {}]
  %s1 = inlined_call_operand.hbm [shape: f32[5,128], index: 1, kind: input, shape index: {}]
  %s2 = inlined_call_operand.hbm [shape: f32[4,128], index: 2, kind: output, shape index: {}]
  %s3 = sld [smem:[#allocation0]]
  $region26: #{tpu_custom_call.1} parent=0
    _
  %s5 = ssub.s32 1, %s3
  %s6 = scalar_select 0, %s5, %s3
  $region1: #{tpu_custom_call.1} parent=0
    #allocation2 [shape = 'u8[2048]{0}', space=vmem, size = 0x800, scoped, tag = 'input window, operand 0, single buffered']
    #allocation3 [shape = 's32[1]{0}', space=sflag, size = 0x4, scoped, tag = 'scoped memory for tpu_custom_call.1']
    #allocation4 [shape = 's32[1]{0}', space=sflag, size = 0x4, scoped, tag = 'scoped memory for tpu_custom_call.1']
    #allocation5 [shape = 'u8[4096]{0}', space=vmem, size = 0x1000, scoped, tag = 'input window, operand 1, single buffered']
    #allocation6 [shape = 's32[1]{0}', space=sflag, size = 0x4, scoped, tag = 'scoped memory for tpu_custom_call.1']
    #allocation7 [shape = 'u8[2048]{0}', space=vmem, size = 0x800, scoped, tag = 'output window, operand 0, single buffered']
    %7 = vsyncpa [#allocation3], 0
    %8 = vsyncpa [#allocation6], 0
    %9 = vsyncpa [#allocation4], 0
    // Predicated region
    $region2: #{tpu_custom_call.1} parent=1 // pred_check
      _
    $region3: #{tpu_custom_call.1} parent=1 // pred_check_branch
      %11 = sbr.rel (0) target = $region5
    $region4: #{tpu_custom_call.1} parent=1 // pred_region
      %13 = vsyncadd [#allocation3], 0
      %s15 = sshll.u32 %s0, 4
      %s16 = int_to_ptr.hbm [resolvable:$true] %s15
      %s17 = sshll.u32 [#allocation2], 4
      %s18 = int_to_ptr.vmem [resolvable:$true] %s17
      %20 = dma.hbm_to_vmem [thread:$0]  %s16, 64, %s18, [#allocation3]
    $region5: #{tpu_custom_call.1} parent=1 // pred_fallthru
      _
    // Predicated region
    $region6: #{tpu_custom_call.1} parent=1 // pred_check
      _
    $region7: #{tpu_custom_call.1} parent=1 // pred_check_branch
      %22 = sbr.rel (0) target = $region9
    $region8: #{tpu_custom_call.1} parent=1 // pred_region
      %24 = vsyncadd [#allocation6], 0
      %s26 = sshll.u32 %s1, 4
      %s27 = int_to_ptr.hbm [resolvable:$true] %s26
      %s28 = sshll.u32 [#allocation5], 4
      %s29 = int_to_ptr.vmem [resolvable:$true] %s28
      %31 = dma.hbm_to_vmem [thread:$0]  %s27, 128, %s29, [#allocation6]
    $region9: #{tpu_custom_call.1} parent=1 // pred_fallthru
      _
    // Predicated region
    $region10: #{tpu_custom_call.1} parent=1 // pred_check
      _
    $region11: #{tpu_custom_call.1} parent=1 // pred_check_branch
      %33 = sbr.rel (0) target = $region13
    $region12: #{tpu_custom_call.1} parent=1 // pred_region
      %35 = dma.done [#allocation3], 64
    $region13: #{tpu_custom_call.1} parent=1 // pred_fallthru
      _
    // Predicated region
    $region14: #{tpu_custom_call.1} parent=1 // pred_check
      _
    $region15: #{tpu_custom_call.1} parent=1 // pred_check_branch
      %37 = sbr.rel (0) target = $region17
    $region16: #{tpu_custom_call.1} parent=1 // pred_region
      %39 = dma.done [#allocation6], 128
    $region17: #{tpu_custom_call.1} parent=1 // pred_fallthru
      _
    %v40 = vld [vmem:[#allocation2] sm:$0xf]
    %v41 = vld [vmem:[#allocation5 + $0x1] sm:$0x1]
    %43 = vset.pattern.permute.xlu0 0
    %44 = vperm.xlu0 %43, %v40
    %v45 = vpop.permute.xlu0 %44
    %v47 = vperm.slane %v41, 0
    %v48 = vmul.f32 %v45, %v47
    %v49 = vld [vmem:[#allocation5 + $0x2] sm:$0x1]
    %50 = vset.pattern.permute.xlu0 1
    %51 = vperm.xlu0 %50, %v40
    %v52 = vpop.permute.xlu0 %51
    %v54 = vperm.slane %v49, 0
    %v55 = vmul.f32 %v52, %v54
    %v56 = vadd.f32 %v48, %v55
    %v57 = vld [vmem:[#allocation5 + $0x3] sm:$0x1]
    %58 = vset.pattern.permute.xlu0 2
    %59 = vperm.xlu0 %58, %v40
    %v60 = vpop.permute.xlu0 %59
    %v62 = vperm.slane %v57, 0
    %v63 = vmul.f32 %v60, %v62
    %v64 = vadd.f32 %v56, %v63
    %v65 = vld [vmem:[#allocation5 + $0x4] sm:$0x1]
    %66 = vset.pattern.permute.xlu0 3
    %67 = vperm.xlu0 %66, %v40
    %v68 = vpop.permute.xlu0 %67
    %v70 = vperm.slane %v65, 0
    %v71 = vmul.f32 %v68, %v70
    %v72 = vadd.f32 %v64, %v71
    %v73 = vld [vmem:[#allocation5] sm:$0x1]
    %vm74 = vcmp.gt.f32.partialorder %v73, 0.5
    %v75 = vand.u32 2147483647, %v72
    %vm76 = vcmp.le.f32.partialorder %v75, 0.7853982
    %vm77 = vcmp.lt.s32.totalorder %v72, 0
    %v78 = vand.u32 %v72, 2139095040
    %v79 = vshrl.u32 %v78, 23
    %v80 = vsub.s32 %v79, 127
    %v81 = vand.u32 2147483647, %v72
    %v82 = vand.u32 %v81, 8388607
    %v83 = vor.u32 %v82, 8388608
    %v84 = vsub.s32 0, %v83
    %v85 = vadd.s32 %v80, 1
    %vm86 = vcmp.gt.s32.totalorder %v85, 0
    %v87 = vsel %vm86, %v85, 0
    %v88 = vshrl.u32 %v87, 5
    %v89 = vand.u32 %v87, 31
    %v90 = vsub.s32 32, %v89
    %v91 = vshrl.u32 683565275, %v90
    %v92 = vshll.u32 683565275, %v89
    %v93 = vshrl.u32 2475754826, %v90
    %v94 = vor.u32 %v92, %v93
    %v95 = vshll.u32 2475754826, %v89
    %v96 = vshrl.u32 2131351028, %v90
    %v97 = vor.u32 %v95, %v96
    %v98 = vshll.u32 2131351028, %v89
    %v99 = vshrl.u32 2102212464, %v90
    %v100 = vor.u32 %v98, %v99
    %v101 = vshll.u32 2102212464, %v89
    %v102 = vshrl.u32 920167782, %v90
    %v103 = vor.u32 %v101, %v102
    %v104 = vshll.u32 920167782, %v89
    %v105 = vshrl.u32 1326507024, %v90
    %v106 = vor.u32 %v104, %v105
    %vm107 = vcmp.lt.s32.totalorder %v88, 1
    %vm108 = vcmp.lt.s32.totalorder %v88, 2
    %vm109 = vcmp.lt.s32.totalorder %v88, 3
    %vm110 = vcmp.lt.s32.totalorder %v88, 4
    %v111 = vsel %vm107, %v91, %v94
    %v112 = vsel %vm110, %v100, 2102212464
    %v113 = vsel %vm109, %v97, %v112
    %v114 = vsel %vm108, %v111, %v113
    %v115 = vsel %vm107, %v94, %v97
    %v116 = vsel %vm110, %v103, 920167782
    %v117 = vsel %vm109, %v100, %v116
    %v118 = vsel %vm108, %v115, %v117
    %v119 = vsel %vm107, %v97, %v100
    %v120 = vsel %vm110, %v106, 1326507024
    %v121 = vsel %vm109, %v103, %v120
    %v122 = vsel %vm108, %v119, %v121
    %v123 = vshll.u32 %v83, 8
    %v124 = vand.u32 %v123, 65535
    %v125 = vshrl.u32 %v123, 16
    %v126 = vand.u32 %v122, 65535
    %v127 = vshrl.u32 %v122, 16
    %v128 = vmul.u32 %v124, %v126
    %v129 = vmul.u32 %v124, %v127
    %v130 = vmul.u32 %v125, %v126
    %v131 = vmul.u32 %v125, %v127
    %v132 = vshll.u32 %v129, 16
    %v133 = vshrl.u32 %v129, 16
    %v134 = vshll.u32 %v130, 16
    %v135 = vshrl.u32 %v130, 16
    %vm136 = vc.u32 %v128, %v132
    %v137 = vsel %vm136, 1, 0
    %v138 = vadd.s32 %v128, %v132
    %v139 = vadd.s32 %v131, %v137
    %vm140 = vc.u32 %v138, %v134
    %v141 = vsel %vm140, 1, 0
    %v142 = vadd.s32 %v138, %v134
    %v143 = vadd.s32 %v139, %v141
    %v144 = vadd.s32 %v143, %v133
    %v145 = vadd.s32 %v144, %v135
    %v146 = vand.u32 %v123, 65535
    %v147 = vshrl.u32 %v123, 16
    %v148 = vand.u32 %v118, 65535
    %v149 = vshrl.u32 %v118, 16
    %v150 = vmul.u32 %v146, %v148
    %v151 = vmul.u32 %v146, %v149
    %v152 = vmul.u32 %v147, %v148
    %v153 = vmul.u32 %v147, %v149
    %v154 = vshll.u32 %v151, 16
    %v155 = vshrl.u32 %v151, 16
    %v156 = vshll.u32 %v152, 16
    %v157 = vshrl.u32 %v152, 16
    %vm158 = vc.u32 %v150, %v154
    %v159 = vsel %vm158, 1, 0
    %v160 = vadd.s32 %v150, %v154
    %v161 = vadd.s32 %v153, %v159
    %vm162 = vc.u32 %v160, %v156
    %v163 = vsel %vm162, 1, 0
    %v164 = vadd.s32 %v160, %v156
    %v165 = vadd.s32 %v161, %v163
    %v166 = vadd.s32 %v165, %v155
    %v167 = vadd.s32 %v166, %v157
    %v168 = vmul.u32 %v123, %v114
    %v169 = vadd.s32 %v145, %v164
    %vm170 = vc.u32 %v145, %v164
    %v171 = vadd.s32 %v167, 1
    %v172 = vsel %vm170, %v171, %v167
    %v173 = vadd.s32 %v168, %v172
    %v174 = vadd.s32 %v173, 536870912
    %v175 = vshrl.u32 %v174, 30
    %v176 = vshll.u32 %v175, 30
    %v177 = vsub.s32 %v173, %v176
    %vm178 = vcmp.lt.s32.totalorder %v177, 0
    %v179 = vsub.s32 0, %v177
    %v180 = vsel %vm178, %v179, %v177
    %v181 = vclz %v180
    %v182 = vsub.s32 %v181, 2
    %vm183 = vcmp.gt.s32.totalorder 0, %v182
    %v184 = vsel %vm183, 0, %v182
    %v185 = vsub.s32 32, %v184
    %v186 = vshll.u32 %v177, %v184
    %v187 = vshrl.u32 %v169, %v185
    %v188 = vor.u32 %v186, %v187
    %v189 = vsub.s32 4294967266, %v184
    %v190 = vadd.s32 %v189, 127
    %v191 = vshll.u32 %v190, 23
    %v192 = vor.u32 4788187, %v191
    %v193 = vand.u32 2147483647, %v192
    %v195 = vcvt.s32.f32 %v188
    %v196 = vmul.f32 %v195, %v193
    %v197 = vxor.u32 %v196, 2147483648
    %v198 = vsel %vm77, %v197, %v196
    %v199 = vsub.s32 4, %v175
    %v200 = vsel %vm77, %v199, %v175
    %v201 = vsel %vm76, %v72, %v198
    %v202 = vsel %vm76, 0, %v200
    %v203 = vmul.f32 %v201, %v201
    %v204 = vmul.f32 %v203, -0.001358992
    %v205 = vadd.f32 %v204, 0.041655596
    %v206 = vmul.f32 %v203, %v205
    %v207 = vadd.f32 %v206, -0.4999988
    %v208 = vmul.f32 %v203, %v207
    %v209 = vadd.f32 1.0, %v208
    %v210 = vmul.f32 %v201, %v201
    %v211 = vmul.f32 %v210, -0.00019511016
    %v212 = vadd.f32 %v211, 0.008332121
    %v213 = vmul.f32 %v210, %v212
    %v214 = vadd.f32 %v213, -0.16666654
    %v215 = vmul.f32 %v210, %v214
    %v216 = vadd.f32 %v215, 1.0
    %v217 = vmul.f32 %v216, %v201
    %vm218 = vweird.f32 %v72
    %v219 = vand.u32 %v202, 3
    %vm220 = vcmp.lt.s32.totalorder %v219, 2
    %vm221 = vcmp.eq.s32.totalorder %v219, 0
    %v222 = vxor.u32 %v217, 2147483648
    %v223 = vsel %vm221, %v209, %v222
    %vm224 = vcmp.eq.s32.totalorder %v219, 2
    %v225 = vxor.u32 %v209, 2147483648
    %v226 = vsel %vm224, %v225, %v217
    %v227 = vsel %vm220, %v223, %v226
    %v228 = vsel %vm218, nan, %v227
    %v229 = vand.u32 2147483647, %v72
    %vm230 = vcmp.le.f32.partialorder %v229, 0.7853982
    %vm231 = vcmp.lt.s32.totalorder %v72, 0
    %v232 = vand.u32 %v72, 2139095040
    %v233 = vshrl.u32 %v232, 23
    %v234 = vsub.s32 %v233, 127
    %v235 = vand.u32 2147483647, %v72
    %v236 = vand.u32 %v235, 8388607
    %v237 = vor.u32 %v236, 8388608
    %v238 = vsub.s32 0, %v237
    %v239 = vadd.s32 %v234, 1
    %vm240 = vcmp.gt.s32.totalorder %v239, 0
    %v241 = vsel %vm240, %v239, 0
    %v242 = vshrl.u32 %v241, 5
    %v243 = vand.u32 %v241, 31
    %v244 = vsub.s32 32, %v243
    %v245 = vshrl.u32 683565275, %v244
    %v246 = vshll.u32 683565275, %v243
    %v247 = vshrl.u32 2475754826, %v244
    %v248 = vor.u32 %v246, %v247
    %v249 = vshll.u32 2475754826, %v243
    %v250 = vshrl.u32 2131351028, %v244
    %v251 = vor.u32 %v249, %v250
    %v252 = vshll.u32 2131351028, %v243
    %v253 = vshrl.u32 2102212464, %v244
    %v254 = vor.u32 %v252, %v253
    %v255 = vshll.u32 2102212464, %v243
    %v256 = vshrl.u32 920167782, %v244
    %v257 = vor.u32 %v255, %v256
    %v258 = vshll.u32 920167782, %v243
    %v259 = vshrl.u32 1326507024, %v244
    %v260 = vor.u32 %v258, %v259
    %vm261 = vcmp.lt.s32.totalorder %v242, 1
    %vm262 = vcmp.lt.s32.totalorder %v242, 2
    %vm263 = vcmp.lt.s32.totalorder %v242, 3
    %vm264 = vcmp.lt.s32.totalorder %v242, 4
    %v265 = vsel %vm261, %v245, %v248
    %v266 = vsel %vm264, %v254, 2102212464
    %v267 = vsel %vm263, %v251, %v266
    %v268 = vsel %vm262, %v265, %v267
    %v269 = vsel %vm261, %v248, %v251
    %v270 = vsel %vm264, %v257, 920167782
    %v271 = vsel %vm263, %v254, %v270
    %v272 = vsel %vm262, %v269, %v271
    %v273 = vsel %vm261, %v251, %v254
    %v274 = vsel %vm264, %v260, 1326507024
    %v275 = vsel %vm263, %v257, %v274
    %v276 = vsel %vm262, %v273, %v275
    %v277 = vshll.u32 %v237, 8
    %v278 = vand.u32 %v277, 65535
    %v279 = vshrl.u32 %v277, 16
    %v280 = vand.u32 %v276, 65535
    %v281 = vshrl.u32 %v276, 16
    %v282 = vmul.u32 %v278, %v280
    %v283 = vmul.u32 %v278, %v281
    %v284 = vmul.u32 %v279, %v280
    %v285 = vmul.u32 %v279, %v281
    %v286 = vshll.u32 %v283, 16
    %v287 = vshrl.u32 %v283, 16
    %v288 = vshll.u32 %v284, 16
    %v289 = vshrl.u32 %v284, 16
    %vm290 = vc.u32 %v282, %v286
    %v291 = vsel %vm290, 1, 0
    %v292 = vadd.s32 %v282, %v286
    %v293 = vadd.s32 %v285, %v291
    %vm294 = vc.u32 %v292, %v288
    %v295 = vsel %vm294, 1, 0
    %v296 = vadd.s32 %v292, %v288
    %v297 = vadd.s32 %v293, %v295
    %v298 = vadd.s32 %v297, %v287
    %v299 = vadd.s32 %v298, %v289
    %v300 = vand.u32 %v277, 65535
    %v301 = vshrl.u32 %v277, 16
    %v302 = vand.u32 %v272, 65535
    %v303 = vshrl.u32 %v272, 16
    %v304 = vmul.u32 %v300, %v302
    %v305 = vmul.u32 %v300, %v303
    %v306 = vmul.u32 %v301, %v302
    %v307 = vmul.u32 %v301, %v303
    %v308 = vshll.u32 %v305, 16
    %v309 = vshrl.u32 %v305, 16
    %v310 = vshll.u32 %v306, 16
    %v311 = vshrl.u32 %v306, 16
    %vm312 = vc.u32 %v304, %v308
    %v313 = vsel %vm312, 1, 0
    %v314 = vadd.s32 %v304, %v308
    %v315 = vadd.s32 %v307, %v313
    %vm316 = vc.u32 %v314, %v310
    %v317 = vsel %vm316, 1, 0
    %v318 = vadd.s32 %v314, %v310
    %v319 = vadd.s32 %v315, %v317
    %v320 = vadd.s32 %v319, %v309
    %v321 = vadd.s32 %v320, %v311
    %v322 = vmul.u32 %v277, %v268
    %v323 = vadd.s32 %v299, %v318
    %vm324 = vc.u32 %v299, %v318
    %v325 = vadd.s32 %v321, 1
    %v326 = vsel %vm324, %v325, %v321
    %v327 = vadd.s32 %v322, %v326
    %v328 = vadd.s32 %v327, 536870912
    %v329 = vshrl.u32 %v328, 30
    %v330 = vshll.u32 %v329, 30
    %v331 = vsub.s32 %v327, %v330
    %vm332 = vcmp.lt.s32.totalorder %v331, 0
    %v333 = vsub.s32 0, %v331
    %v334 = vsel %vm332, %v333, %v331
    %v335 = vclz %v334
    %v336 = vsub.s32 %v335, 2
    %vm337 = vcmp.gt.s32.totalorder 0, %v336
    %v338 = vsel %vm337, 0, %v336
    %v339 = vsub.s32 32, %v338
    %v340 = vshll.u32 %v331, %v338
    %v341 = vshrl.u32 %v323, %v339
    %v342 = vor.u32 %v340, %v341
    %v343 = vsub.s32 4294967266, %v338
    %v344 = vadd.s32 %v343, 127
    %v345 = vshll.u32 %v344, 23
    %v346 = vor.u32 4788187, %v345
    %v347 = vand.u32 2147483647, %v346
    %v349 = vcvt.s32.f32 %v342
    %v350 = vmul.f32 %v349, %v347
    %v351 = vxor.u32 %v350, 2147483648
    %v352 = vsel %vm231, %v351, %v350
    %v353 = vsub.s32 4, %v329
    %v354 = vsel %vm231, %v353, %v329
    %v355 = vsel %vm230, %v72, %v352
    %v356 = vsel %vm230, 0, %v354
    %v357 = vmul.f32 %v355, %v355
    %v358 = vmul.f32 %v357, -0.001358992
    %v359 = vadd.f32 %v358, 0.041655596
    %v360 = vmul.f32 %v357, %v359
    %v361 = vadd.f32 %v360, -0.4999988
    %v362 = vmul.f32 %v357, %v361
    %v363 = vadd.f32 1.0, %v362
    %v364 = vmul.f32 %v355, %v355
    %v365 = vmul.f32 %v364, -0.00019511016
    %v366 = vadd.f32 %v365, 0.008332121
    %v367 = vmul.f32 %v364, %v366
    %v368 = vadd.f32 %v367, -0.16666654
    %v369 = vmul.f32 %v364, %v368
    %v370 = vadd.f32 %v369, 1.0
    %v371 = vmul.f32 %v370, %v355
    %vm372 = vweird.f32 %v72
    %v373 = vadd.s32 %v356, 3
    %v374 = vand.u32 %v373, 3
    %vm375 = vcmp.lt.s32.totalorder %v374, 2
    %vm376 = vcmp.eq.s32.totalorder %v374, 0
    %v377 = vxor.u32 %v371, 2147483648
    %v378 = vsel %vm376, %v363, %v377
    %vm379 = vcmp.eq.s32.totalorder %v374, 2
    %v380 = vxor.u32 %v363, 2147483648
    %v381 = vsel %vm379, %v380, %v371
    %v382 = vsel %vm375, %v378, %v381
    %v383 = vsel %vm372, nan, %v382
    %v384 = vsel %vm74, 1, 0
    %v385 = vperm.slane %v384, 0
    %vm386 = vcmp.eq.s32.totalorder %v385, 1
    %v387 = vsel %vm386, %v228, %v383
    %388 = vst [vmem:[#allocation7] sm:$0xf] %v387
    // Predicated region
    $region18: #{tpu_custom_call.1} parent=1 // pred_check
      _
    $region19: #{tpu_custom_call.1} parent=1 // pred_check_branch
      %390 = sbr.rel (0) target = $region21
    $region20: #{tpu_custom_call.1} parent=1 // pred_region
      %392 = vsyncadd [#allocation4], 0
      %s394 = sshll.u32 [#allocation7], 4
      %s395 = int_to_ptr.vmem [resolvable:$true] %s394
      %s396 = sshll.u32 %s2, 4
      %s397 = int_to_ptr.hbm [resolvable:$true] %s396
      %399 = dma.vmem_to_hbm [thread:$0]  %s395, 64, %s397, [#allocation4]
    $region21: #{tpu_custom_call.1} parent=1 // pred_fallthru
      _
    // Predicated region
    $region22: #{tpu_custom_call.1} parent=1 // pred_check
      _
    $region23: #{tpu_custom_call.1} parent=1 // pred_check_branch
      %401 = sbr.rel (0) target = $region25
    $region24: #{tpu_custom_call.1} parent=1 // pred_region
      %403 = dma.done [#allocation4], 64
    $region25: #{tpu_custom_call.1} parent=1 // pred_fallthru
      _
    %404 = vsyncpa [#allocation3], 1
    %405 = vsyncpa [#allocation6], 1
    %406 = vsyncpa [#allocation4], 1

</llo_original>
